<compile_context>
chip_gen: v7x
topology: tpu7x:2x2x1
jax: 0.10.0
libtpu: 0.0.40
codegen_flags: <defaults>
</compile_context>

<pallas_src>
import functools

import jax
import jax.numpy as jnp
from jax.experimental import pallas as pl
from jax.experimental.pallas import tpu as pltpu


def _tv_kernel(x_ref, h_out_ref, w_out_ref, acc_h_ref, acc_w_ref, *, img_w, flat_len):
    # x_ref:      (TB, L) block of flattened planes (L = H*W, lane-dense)
    # h_out_ref:  (1, 8, 128) per-core output block for the vertical-diff sum
    # w_out_ref:  (1, 8, 128) per-core output block for the horizontal-diff sum
    # acc_*_ref:  (1, L) f32 per-lane accumulators (VMEM scratch, persist per core)
    k = pl.program_id(1)

    @pl.when(k == 0)
    def _init():
        acc_h_ref[...] = jnp.zeros_like(acc_h_ref)
        acc_w_ref[...] = jnp.zeros_like(acc_w_ref)

    x = x_ref[...].astype(jnp.float32)  # (TB, L)
    tb = x.shape[0]
    l = flat_len

    # Neighbour "one image-row down": element at flat position p + img_w.
    # np.roll-style rotate right by (L - img_w) == rotate left by img_w.
    x_down = pltpu.roll(x, shift=l - img_w, axis=1)
    # Neighbour "one column right": element at flat position p + 1.
    x_right = pltpu.roll(x, shift=l - 1, axis=1)

    pos = jax.lax.broadcasted_iota(jnp.int32, (tb, l), 1)
    # Vertical diffs valid for image rows 0..H-2  <=>  p < L - W.
    dv = jnp.where(pos < (l - img_w), x_down - x, 0.0)
    # Horizontal diffs valid for image cols 0..W-2  <=>  p mod W != W-1.
    dw = jnp.where((pos % img_w) != (img_w - 1), x_right - x, 0.0)

    # Per-lane partial sums (VPU adds + one sublane fold); no scalar reduce here.
    acc_h_ref[...] += jnp.sum(dv * dv, axis=0, keepdims=True)
    acc_w_ref[...] += jnp.sum(dw * dw, axis=0, keepdims=True)

    @pl.when(k == pl.num_programs(1) - 1)
    def _finalize():
        h_tot = jnp.sum(acc_h_ref[...])
        w_tot = jnp.sum(acc_w_ref[...])
        # Fill the whole aligned block (unmasked lane-dense store); wrapper reads [.,0,0].
        h_out_ref[...] = jnp.broadcast_to(h_tot, (1, 8, 128)).astype(jnp.float32)
        w_out_ref[...] = jnp.broadcast_to(w_tot, (1, 8, 128)).astype(jnp.float32)


def tv_loss(x, tv_loss_weight: float = 1.0):
    """x: (N, C, H, W). Returns scalar TV loss matching the PyTorch TVLoss module."""
    n, c, h, w = x.shape
    planes = n * c
    flat_len = h * w

    x2 = x.reshape(planes, flat_len)  # lane-dense 2D view

    # ----- block sizing: many planes per grid step, ~4 MiB per block so the
    # double-buffered input fits comfortably in scoped VMEM on v5e/v6e/v7x. -----
    bytes_per_plane = flat_len * x.dtype.itemsize
    target_block_bytes = 4 * 1024 * 1024
    cap = max(1, target_block_bytes // bytes_per_plane)
    tb0 = min(cap, -(-planes // 2))                 # let the 2 parallel slices split real data
    tb0 = max(8, ((tb0 + 7) // 8) * 8)              # sublane-aligned
    kblocks = -(-planes // (2 * tb0))               # steps along the reduction axis per core
    tb = max(8, ((-(-planes // (2 * kblocks)) + 7) // 8) * 8)  # rebalance to minimize padding
    padded = 2 * tb * kblocks
    # TODO(synk): extremely large single planes (8 * H*W * 4B > ~16 MiB) would need
    # intra-plane tiling with halos; not needed for the shapes exercised here.

    if padded != planes:
        # Zero planes contribute exactly zero to both sums.
        x2 = jnp.pad(x2, ((0, padded - planes), (0, 0)))

    kernel = functools.partial(_tv_kernel, img_w=w, flat_len=flat_len)

    h_parts, w_parts = pl.pallas_call(
        kernel,
        out_shape=(
            jax.ShapeDtypeStruct((2, 8, 128), jnp.float32),
            jax.ShapeDtypeStruct((2, 8, 128), jnp.float32),
        ),
        grid_spec=pltpu.PrefetchScalarGridSpec(
            num_scalar_prefetch=0,
            grid=(2, kblocks),
            in_specs=[
                pl.BlockSpec((tb, flat_len), lambda i, k: (i * kblocks + k, 0)),
            ],
            out_specs=(
                pl.BlockSpec((1, 8, 128), lambda i, k: (i, 0, 0)),
                pl.BlockSpec((1, 8, 128), lambda i, k: (i, 0, 0)),
            ),
            scratch_shapes=[
                pltpu.VMEM((1, flat_len), jnp.float32),
                pltpu.VMEM((1, flat_len), jnp.float32),
            ],
        ),
        compiler_params=pltpu.CompilerParams(
            dimension_semantics=("parallel", "arbitrary"),
            vmem_limit_bytes=32 * 1024 * 1024,
        ),
    )(x2)

    h_tv = h_parts[0, 0, 0] + h_parts[1, 0, 0]
    w_tv = w_parts[0, 0, 0] + w_parts[1, 0, 0]
    count_h = c * (h - 1) * w
    count_w = c * h * (w - 1)
    return tv_loss_weight * 2.0 * (h_tv / count_h + w_tv / count_w) / n


def tv_loss_ref(x, tv_loss_weight: float = 1.0):
    n, c, h, w = x.shape
    count_h = c * (h - 1) * w
    count_w = c * h * (w - 1)
    h_tv = jnp.sum((x[:, :, 1:, :] - x[:, :, :-1, :]) ** 2)
    w_tv = jnp.sum((x[:, :, :, 1:] - x[:, :, :, :-1]) ** 2)
    return tv_loss_weight * 2.0 * (h_tv / count_h + w_tv / count_w) / n


if __name__ == "__main__":
    key = jax.random.PRNGKey(0)
    x = jax.random.normal(key, (2, 4, 16, 16), dtype=jnp.float32)

    out = tv_loss(x, tv_loss_weight=1.0)
    out = jax.block_until_ready(out)

    ref = tv_loss_ref(x, tv_loss_weight=1.0)
    assert jnp.allclose(out, ref, rtol=1e-5, atol=1e-5), (out, ref)
    print("KERNEL_OK")
</pallas_src>

<mosaic_0001>
module attributes {stable_mosaic.version = 11 : i64} {
  func.func @_tv_kernel(%arg0: i32, %arg1: i32, %arg2: memref<8x256xf32, #tpu.memory_space<vmem>>, %arg3: memref<1x8x128xf32, #tpu.memory_space<vmem>>, %arg4: memref<1x8x128xf32, #tpu.memory_space<vmem>>, %arg5: memref<1x256xf32, #tpu.memory_space<vmem>>, %arg6: memref<1x256xf32, #tpu.memory_space<vmem>>) attributes {dimension_semantics = [#tpu.dimension_semantics<parallel>, #tpu.dimension_semantics<arbitrary>], iteration_bounds = array<i64: 2, 1>, scalar_prefetch = 0 : i64, scratch_operands = 2 : i64, tpu.core_type = #tpu.core_type<tc>, window_params = [{transform_indices = @transform_0, window_bounds = array<i64: 8, 256>}, {transform_indices = @transform_1, window_bounds = array<i64: 1, 8, 128>}, {transform_indices = @transform_2, window_bounds = array<i64: 1, 8, 128>}]} {
    %c0_i32 = arith.constant 0 : i32
    %0 = arith.cmpi eq, %arg1, %c0_i32 : i32
    %1 = arith.extui %0 : i1 to i32
    %c0_i32_0 = arith.constant 0 : i32
    %2 = arith.cmpi ne, %1, %c0_i32_0 : i32
    scf.if %2 {
      %cst_20 = arith.constant 0.000000e+00 : f32
      %48 = vector.broadcast %cst_20 : f32 to vector<1x256xf32>
      %c0_21 = arith.constant 0 : index
      %c0_22 = arith.constant 0 : index
      %49 = vector.load %arg5[%c0_21, %c0_22] : memref<1x256xf32, #tpu.memory_space<vmem>>, vector<1x256xf32>
      tpu.vector_store %arg5[%c0_21, %c0_22], %48 {strides = array<i32>} : memref<1x256xf32, #tpu.memory_space<vmem>>, vector<1x256xf32>,
      %cst_23 = arith.constant 0.000000e+00 : f32
      %50 = vector.broadcast %cst_23 : f32 to vector<1x256xf32>
      %c0_24 = arith.constant 0 : index
      %c0_25 = arith.constant 0 : index
      %51 = vector.load %arg6[%c0_24, %c0_25] : memref<1x256xf32, #tpu.memory_space<vmem>>, vector<1x256xf32>
      tpu.vector_store %arg6[%c0_24, %c0_25], %50 {strides = array<i32>} : memref<1x256xf32, #tpu.memory_space<vmem>>, vector<1x256xf32>,
    } else {
    }
    %c0 = arith.constant 0 : index
    %c0_1 = arith.constant 0 : index
    %3 = vector.load %arg2[%c0, %c0_1] : memref<8x256xf32, #tpu.memory_space<vmem>>, vector<8x256xf32>
    %c240_i32 = arith.constant 240 : i32
    %4 = tpu.dynamic_rotate %3 by %c240_i32 dim 1 : vector<8x256xf32>, i32 -> vector<8x256xf32>
    %c255_i32 = arith.constant 255 : i32
    %5 = tpu.dynamic_rotate %3 by %c255_i32 dim 1 : vector<8x256xf32>, i32 -> vector<8x256xf32>
    %6 = tpu.iota {dimensions = array<i32: 1>} : vector<8x256xi32>
    %c240_i32_2 = arith.constant 240 : i32
    %7 = vector.broadcast %c240_i32_2 : i32 to vector<8x256xi32>
    %8 = arith.cmpi slt, %6, %7 : vector<8x256xi32>
    %9 = arith.subf %4, %3 : vector<8x256xf32>
    %cst = arith.constant 0.000000e+00 : f32
    %10 = vector.broadcast %cst : f32 to vector<8x256xf32>
    %11 = arith.select %8, %9, %10 : vector<8x256xi1>, vector<8x256xf32>
    %c16_i32 = arith.constant 16 : i32
    %c0_i32_3 = arith.constant 0 : i32
    %12 = arith.cmpi eq, %c16_i32, %c0_i32_3 : i32
    %c1_i32 = arith.constant 1 : i32
    %13 = arith.select %12, %c1_i32, %c16_i32 : i32
    %14 = vector.broadcast %13 : i32 to vector<8x256xi32>
    %15 = arith.remsi %6, %14 : vector<8x256xi32>
    %c0_i32_4 = arith.constant 0 : i32
    %16 = vector.broadcast %c0_i32_4 : i32 to vector<8x256xi32>
    %17 = arith.cmpi ne, %15, %16 : vector<8x256xi32>
    %c0_i32_5 = arith.constant 0 : i32
    %18 = vector.broadcast %c0_i32_5 : i32 to vector<8x256xi32>
    %19 = arith.cmpi slt, %15, %18 : vector<8x256xi32>
    %c0_i32_6 = arith.constant 0 : i32
    %20 = arith.cmpi slt, %13, %c0_i32_6 : i32
    %21 = vector.broadcast %20 : i1 to vector<8x256xi1>
    %22 = vector.broadcast %21 : vector<8x256xi1> to vector<8x256xi1>
    %23 = arith.xori %19, %22 : vector<8x256xi1>
    %24 = arith.andi %23, %17 : vector<8x256xi1>
    %25 = vector.broadcast %13 : i32 to vector<8x256xi32>
    %26 = arith.addi %15, %25 : vector<8x256xi32>
    %27 = arith.select %24, %26, %15 : vector<8x256xi1>, vector<8x256xi32>
    %c15_i32 = arith.constant 15 : i32
    %28 = vector.broadcast %c15_i32 : i32 to vector<8x256xi32>
    %29 = arith.cmpi ne, %27, %28 : vector<8x256xi32>
    %30 = arith.subf %5, %3 : vector<8x256xf32>
    %cst_7 = arith.constant 0.000000e+00 : f32
    %31 = vector.broadcast %cst_7 : f32 to vector<8x256xf32>
    %32 = arith.select %29, %30, %31 : vector<8x256xi1>, vector<8x256xf32>
    %c0_8 = arith.constant 0 : index
    %c0_9 = arith.constant 0 : index
    %33 = vector.load %arg5[%c0_8, %c0_9] : memref<1x256xf32, #tpu.memory_space<vmem>>, vector<1x256xf32>
    %34 = arith.mulf %11, %11 : vector<8x256xf32>
    %cst_10 = arith.constant dense<0.000000e+00> : vector<256xf32>
    %35 = vector.multi_reduction <add>, %34, %cst_10 [0] : vector<8x256xf32> to vector<256xf32>
    %36 = vector.shape_cast %35 : vector<256xf32> to vector<1x256xf32>
    %37 = arith.addf %33, %36 : vector<1x256xf32>
    %c0_11 = arith.constant 0 : index
    %c0_12 = arith.constant 0 : index
    %38 = vector.load %arg5[%c0_11, %c0_12] : memref<1x256xf32, #tpu.memory_space<vmem>>, vector<1x256xf32>
    tpu.vector_store %arg5[%c0_11, %c0_12], %37 {strides = array<i32>} : memref<1x256xf32, #tpu.memory_space<vmem>>, vector<1x256xf32>,
    %c0_13 = arith.constant 0 : index
    %c0_14 = arith.constant 0 : index
    %39 = vector.load %arg6[%c0_13, %c0_14] : memref<1x256xf32, #tpu.memory_space<vmem>>, vector<1x256xf32>
    %40 = arith.mulf %32, %32 : vector<8x256xf32>
    %cst_15 = arith.constant dense<0.000000e+00> : vector<256xf32>
    %41 = vector.multi_reduction <add>, %40, %cst_15 [0] : vector<8x256xf32> to vector<256xf32>
    %42 = vector.shape_cast %41 : vector<256xf32> to vector<1x256xf32>
    %43 = arith.addf %39, %42 : vector<1x256xf32>
    %c0_16 = arith.constant 0 : index
    %c0_17 = arith.constant 0 : index
    %44 = vector.load %arg6[%c0_16, %c0_17] : memref<1x256xf32, #tpu.memory_space<vmem>>, vector<1x256xf32>
    tpu.vector_store %arg6[%c0_16, %c0_17], %43 {strides = array<i32>} : memref<1x256xf32, #tpu.memory_space<vmem>>, vector<1x256xf32>,
    %c0_i32_18 = arith.constant 0 : i32
    %45 = arith.cmpi eq, %arg1, %c0_i32_18 : i32
    %46 = arith.extui %45 : i1 to i32
    %c0_i32_19 = arith.constant 0 : i32
    %47 = arith.cmpi ne, %46, %c0_i32_19 : i32
    scf.if %47 {
      %c0_20 = arith.constant 0 : index
      %c0_21 = arith.constant 0 : index
      %48 = vector.load %arg5[%c0_20, %c0_21] : memref<1x256xf32, #tpu.memory_space<vmem>>, vector<1x256xf32>
      %49 = vector.shape_cast %48 : vector<1x256xf32> to vector<1x1x256xf32>
      %cst_22 = arith.constant dense<0.000000e+00> : vector<1xf32>
      %50 = vector.multi_reduction <add>, %49, %cst_22 [1, 2] : vector<1x1x256xf32> to vector<1xf32>
      %51 = vector.shape_cast %50 : vector<1xf32> to vector<1x1x1xf32>
      %52 = vector.extract %51[0, 0, 0] : f32 from vector<1x1x1xf32>
      %c0_23 = arith.constant 0 : index
      %c0_24 = arith.constant 0 : index
      %53 = vector.load %arg6[%c0_23, %c0_24] : memref<1x256xf32, #tpu.memory_space<vmem>>, vector<1x256xf32>
      %54 = vector.shape_cast %53 : vector<1x256xf32> to vector<1x1x256xf32>
      %cst_25 = arith.constant dense<0.000000e+00> : vector<1xf32>
      %55 = vector.multi_reduction <add>, %54, %cst_25 [1, 2] : vector<1x1x256xf32> to vector<1xf32>
      %56 = vector.shape_cast %55 : vector<1xf32> to vector<1x1x1xf32>
      %57 = vector.extract %56[0, 0, 0] : f32 from vector<1x1x1xf32>
      %58 = vector.broadcast %52 : f32 to vector<1x8x128xf32>
      %c0_26 = arith.constant 0 : index
      %c0_27 = arith.constant 0 : index
      %c0_28 = arith.constant 0 : index
      %59 = vector.load %arg3[%c0_26, %c0_27, %c0_28] : memref<1x8x128xf32, #tpu.memory_space<vmem>>, vector<1x8x128xf32>
      tpu.vector_store %arg3[%c0_26, %c0_27, %c0_28], %58 {strides = array<i32>} : memref<1x8x128xf32, #tpu.memory_space<vmem>>, vector<1x8x128xf32>,
      %60 = vector.broadcast %57 : f32 to vector<1x8x128xf32>
      %c0_29 = arith.constant 0 : index
      %c0_30 = arith.constant 0 : index
      %c0_31 = arith.constant 0 : index
      %61 = vector.load %arg4[%c0_29, %c0_30, %c0_31] : memref<1x8x128xf32, #tpu.memory_space<vmem>>, vector<1x8x128xf32>
      tpu.vector_store %arg4[%c0_29, %c0_30, %c0_31], %60 {strides = array<i32>} : memref<1x8x128xf32, #tpu.memory_space<vmem>>, vector<1x8x128xf32>,
    } else {
    }
    return
  }
  func.func @transform_0(%arg0: i32, %arg1: i32) -> (i32, i32) {
    %c1_i32 = arith.constant 1 : i32
    %0 = arith.muli %arg0, %c1_i32 : i32
    %1 = arith.addi %0, %arg1 : i32
    %c0_i32 = arith.constant 0 : i32
    %c0_i32_0 = arith.constant 0 : i32
    return %1, %c0_i32 : i32, i32
  }
  func.func @transform_1(%arg0: i32, %arg1: i32) -> (i32, i32, i32) {
    %c0_i32 = arith.constant 0 : i32
    %c0_i32_0 = arith.constant 0 : i32
    %c0_i32_1 = arith.constant 0 : i32
    return %arg0, %c0_i32, %c0_i32_0 : i32, i32, i32
  }
  func.func @transform_2(%arg0: i32, %arg1: i32) -> (i32, i32, i32) {
    %c0_i32 = arith.constant 0 : i32
    %c0_i32_0 = arith.constant 0 : i32
    %c0_i32_1 = arith.constant 0 : i32
    return %arg0, %c0_i32, %c0_i32_0 : i32, i32, i32
  }
}

</mosaic_0001>

<llo_original>
// kernel: tpu_custom_call.1
$region0: #{tpu_custom_call.1}
  #allocation0 [shape = 'u32[]', space=smem, size = 0x4, offset = 0x4, fixed_abs, tag = 'smem constant byte address 0x4 - core index']
  #allocation1 [shape = 'u32[144,128]{1,0:T(1,128)}', space=vmem, size = 0x12000, scoped, tag = 'internal scratch']
  #allocation2 [shape = 'f32[1,256]{1,0:T(1,128)}', space=vmem, size = 0x400, scoped, tag = 'scratch operand']
  #allocation3 [shape = 'f32[1,256]{1,0:T(1,128)}', space=vmem, size = 0x400, scoped, tag = 'scratch operand']
  %s0 = inlined_call_operand.hbm [shape: f32[16,256], index: 0, kind: input, shape index: {}]
  %s1 = inlined_call_operand.hbm [shape: f32[2,8,128], index: 1, kind: output, shape index: {0}]
  %s2 = inlined_call_operand.hbm [shape: f32[2,8,128], index: 2, kind: output, shape index: {1}]
  %3 = xla_tuple %s1, %s2
  %s4 = sld [smem:[#allocation0]]
  $region57: #{tpu_custom_call.1} parent=0
    _
  %s6 = ssub.s32 1, %s4
  %s7 = scalar_select 0, %s6, %s4
  $region1: #{tpu_custom_call.1} parent=0
    #allocation4 [shape = 'u8[16384]{0}', space=vmem, size = 0x4000, scoped, tag = 'input window, operand 0']
    #allocation5 [shape = 's32[2]{0}', space=sflag, size = 0x8, scoped, tag = 'scoped memory for tpu_custom_call.1']
    #allocation6 [shape = 's32[2]{0}', space=sflag, size = 0x8, scoped, tag = 'scoped memory for tpu_custom_call.1']
    #allocation7 [shape = 'u8[8192]{0}', space=vmem, size = 0x2000, scoped, tag = 'output window, operand 0']
    #allocation8 [shape = 'u8[8192]{0}', space=vmem, size = 0x2000, scoped, tag = 'output window, operand 1']
    #allocation9 [shape = 's32[2]{0}', space=sflag, size = 0x8, scoped, tag = 'scoped memory for tpu_custom_call.1']
    %8 = vsyncpa [#allocation5], 0
    %s9 = scalar_lea.sflag [#allocation5], 1
    %10 = vsyncpa %s9, 0
    %11 = vsyncpa [#allocation6], 0
    %s12 = scalar_lea.sflag [#allocation6], 1
    %13 = vsyncpa %s12, 0
    %14 = vsyncpa [#allocation9], 0
    %s15 = scalar_lea.sflag [#allocation9], 1
    %16 = vsyncpa %s15, 0
    loop: start=0, step=1, limit=4
    $region2: #{tpu_custom_call.1} parent=1 // loop_pre_header
      _
    $region3: #{tpu_custom_call.1} parent=1 // loop_header
      %s18 = sphi 0, %s22
      %p19 = scmp.ge.s32.totalorder %s18, 4
      %s25 = sphi 0, %s37
      %s26 = sphi 0, %s33
      %s27 = sphi 0, %s25
      %s28 = sphi 0, %s26
      %s29 = sphi 0, %s27
      %s30 = sphi 0, %s28
      %s42 = sphi 0, %s44
      %s45 = sphi 0, %s42
      %s46 = sphi 0, %s45
      %s62 = sphi 0, %s46
      %s68 = sphi 0, %s70
      %s71 = sphi 0, %s68
      %s72 = sphi 0, %s71
      %s88 = sphi 0, %s72
      %s94 = sphi 0, %s96
      %s97 = sphi 0, %s94
      %s98 = sphi 0, %s97
      %s114 = sphi 0, %s98
    $region4: #{tpu_custom_call.1} parent=1 // loop_header_branch
      %21 = sbr.rel (%p19) target = $region8
    $region5: #{tpu_custom_call.1} parent=1 // loop_body
      %s23 = ssub.s32 %s18, 1
      %s24 = ssub.s32 %s18, 2
      %s31 = sadd.s32 1, %s26
      %p32 = scmp.ge.s32.totalorder %s31, 1
      %s33 = scalar_select %p32, 0, %s31
      %s34 = sadd.s32 1, %s25
      %s35 = scalar_select %p32, %s34, %s25
      %p36 = scmp.ge.s32.totalorder %s35, 2
      %s37 = scalar_select %p36, 0, %s35
      %s38 = sadd.s32 %s25, %s26
      %s39 = sadd.s32 %s37, %s33
      %s40 = ssub.s32 %s38, %s39
      %p41 = scmp.eq.s32.totalorder %s40, 0
      %s43 = sadd.s32 %s42, 1
      %s44 = scalar_select %p41, %s42, %s43
      %p47 = pneg %p41
      %p48 = scmp.eq.s32.totalorder %s18, 1
      %p49 = por %p47, %p48
      %p50 = scmp.ne.s32.totalorder %s42, %s45
      %p51 = scmp.eq.s32.totalorder %s18, 0
      %p52 = por %p50, %p51
      %p53 = scmp.ne.s32.totalorder %s42, %s45
      %p54 = scmp.eq.s32.totalorder %s23, 1
      %p55 = por %p53, %p54
      %p56 = scmp.ne.s32.totalorder %s45, %s46
      %p57 = scmp.eq.s32.totalorder %s23, 0
      %p58 = por %p56, %p57
      %p59 = scmp.ne.s32.totalorder %s45, %s46
      %p60 = scmp.eq.s32.totalorder %s24, 1
      %p61 = por %p59, %p60
      %p63 = scmp.ne.s32.totalorder %s46, %s62
      %p64 = scmp.eq.s32.totalorder %s24, 0
      %p65 = por %p63, %p64
      %s66 = ssub.s32 %s25, %s37
      %p67 = scmp.eq.s32.totalorder %s66, 0
      %s69 = sadd.s32 %s68, 1
      %s70 = scalar_select %p67, %s68, %s69
      %p73 = pneg %p67
      %p74 = scmp.eq.s32.totalorder %s18, 1
      %p75 = por %p73, %p74
      %p76 = scmp.ne.s32.totalorder %s68, %s71
      %p77 = scmp.eq.s32.totalorder %s18, 0
      %p78 = por %p76, %p77
      %p79 = scmp.ne.s32.totalorder %s68, %s71
      %p80 = scmp.eq.s32.totalorder %s23, 1
      %p81 = por %p79, %p80
      %p82 = scmp.ne.s32.totalorder %s71, %s72
      %p83 = scmp.eq.s32.totalorder %s23, 0
      %p84 = por %p82, %p83
      %p85 = scmp.ne.s32.totalorder %s71, %s72
      %p86 = scmp.eq.s32.totalorder %s24, 1
      %p87 = por %p85, %p86
      %p89 = scmp.ne.s32.totalorder %s72, %s88
      %p90 = scmp.eq.s32.totalorder %s24, 0
      %p91 = por %p89, %p90
      %s92 = ssub.s32 %s25, %s37
      %p93 = scmp.eq.s32.totalorder %s92, 0
      %s95 = sadd.s32 %s94, 1
      %s96 = scalar_select %p93, %s94, %s95
      %p99 = pneg %p93
      %p100 = scmp.eq.s32.totalorder %s18, 1
      %p101 = por %p99, %p100
      %p102 = scmp.ne.s32.totalorder %s94, %s97
      %p103 = scmp.eq.s32.totalorder %s18, 0
      %p104 = por %p102, %p103
      %p105 = scmp.ne.s32.totalorder %s94, %s97
      %p106 = scmp.eq.s32.totalorder %s23, 1
      %p107 = por %p105, %p106
      %p108 = scmp.ne.s32.totalorder %s97, %s98
      %p109 = scmp.eq.s32.totalorder %s23, 0
      %p110 = por %p108, %p109
      %p111 = scmp.ne.s32.totalorder %s97, %s98
      %p112 = scmp.eq.s32.totalorder %s24, 1
      %p113 = por %p111, %p112
      %p115 = scmp.ne.s32.totalorder %s98, %s114
      %p116 = scmp.eq.s32.totalorder %s24, 0
      %p117 = por %p115, %p116
      %p118 = scmp.le.s32.totalorder 1, %s18
      %p119 = scmp.lt.s32.totalorder %s18, 3
      %p120 = pnand %p118, %p119
      %p121 = pneg %p120
      // Predicated region
      $region9: #{tpu_custom_call.1} parent=5 // pred_check
        _
      $region10: #{tpu_custom_call.1} parent=5 // pred_check_branch
        %123 = sbr.rel (%p120) target = $region12
      $region11: #{tpu_custom_call.1} parent=5 // pred_region
        %s124 = ssub.s32 %s18, 1
      $region12: #{tpu_custom_call.1} parent=5 // pred_fallthru
        _
      %p125 = scmp.lt.s32.totalorder %s18, 2
      // Predicated region
      $region13: #{tpu_custom_call.1} parent=5 // pred_check
        %p126 = pneg %p125
      $region14: #{tpu_custom_call.1} parent=5 // pred_check_branch
        %128 = sbr.rel (%p126) target = $region16
      $region15: #{tpu_custom_call.1} parent=5 // pred_region
        // Predicated region
        $region17: #{tpu_custom_call.1} parent=15 // pred_check
          %p129 = pneg %p52
        $region18: #{tpu_custom_call.1} parent=15 // pred_check_branch
          %131 = sbr.rel (%p129) target = $region20
        $region19: #{tpu_custom_call.1} parent=15 // pred_region
          %s132 = sand.u32 %s42, 1
          %s133 = scalar_lea.sflag [#allocation5], %s132
          %s134 = sand.u32 %s42, 1
          %s135 = smul.addr %s134, 16
          %s136 = scalar_lea.vmem [#allocation4], %s135
          %s137 = sadd.s32 %s25, %s26
          %s139 = ssub.s32 256, 256
          %140 = vsyncadd %s133, %s139
          %s141 = smul.addr %s137, 2
          %s142 = smul.addr %s141, 128
          %s143 = scalar_lea.hbm %s0, %s142
          %s145 = sshll.u32 %s136, 4
          %s146 = int_to_ptr.vmem [resolvable:$true] %s145
          %148 = dma.hbm_to_vmem [thread:$0]  %s143, 256, %s146, %s133
        $region20: #{tpu_custom_call.1} parent=15 // pred_fallthru
          _
      $region16: #{tpu_custom_call.1} parent=5 // pred_fallthru
        _
      %p149 = scmp.le.s32.totalorder 1, %s18
      %p150 = scmp.lt.s32.totalorder %s18, 3
      %p151 = pnand %p149, %p150
      %p152 = pneg %p151
      // Predicated region
      $region21: #{tpu_custom_call.1} parent=5 // pred_check
        _
      $region22: #{tpu_custom_call.1} parent=5 // pred_check_branch
        %154 = sbr.rel (%p151) target = $region24
      $region23: #{tpu_custom_call.1} parent=5 // pred_region
        %s155 = ssub.s32 %s18, 1
        %s156 = sand.u32 %s45, 1
        %s157 = scalar_lea.sflag [#allocation5], %s156
        %s158 = sand.u32 %s45, 1
        %s159 = smul.addr %s158, 16
        %s160 = scalar_lea.vmem [#allocation4], %s159
        // Predicated region
        $region25: #{tpu_custom_call.1} parent=23 // pred_check
          %p161 = pneg %p58
        $region26: #{tpu_custom_call.1} parent=23 // pred_check_branch
          %163 = sbr.rel (%p161) target = $region28
        $region27: #{tpu_custom_call.1} parent=23 // pred_region
          %164 = dma.done %s157, 256
        $region28: #{tpu_custom_call.1} parent=23 // pred_fallthru
          _
        %s165 = sand.u32 %s45, 1
        %s166 = scalar_lea.sflag [#allocation5], %s165
        %s167 = sand.u32 %s45, 1
        %s168 = smul.addr %s167, 16
        %s169 = scalar_lea.vmem [#allocation4], %s168
        %p170 = pneg %p58
        %p171 = pneg %p55
        %p172 = pneg %p84
        %p173 = pneg %p81
        %s174 = sand.u32 %s71, 1
        %s175 = scalar_lea.sflag [#allocation6], %s174
        %s176 = sand.u32 %s71, 1
        %s177 = smul.addr %s176, 8
        %s178 = scalar_lea.vmem [#allocation7], %s177
        %p179 = pneg %p110
        %p180 = pneg %p107
        %s181 = sand.u32 %s97, 1
        %s182 = scalar_lea.sflag [#allocation9], %s181
        %s183 = sand.u32 %s97, 1
        %s184 = smul.addr %s183, 8
        %s185 = scalar_lea.vmem [#allocation8], %s184
        %s186 = sadd.s32 %s27, %s28
        %p187 = scmp.eq.s32.totalorder %s28, 0
        // Predicated region
        $region29: #{tpu_custom_call.1} parent=23 // pred_check
          %p188 = pneg %p187
        $region30: #{tpu_custom_call.1} parent=23 // pred_check_branch
          %190 = sbr.rel (%p188) target = $region32
        $region31: #{tpu_custom_call.1} parent=23 // pred_region
          %v191 = vlaneseq
          %vm192 = vcmp.ge.s32.totalorder %v191, 0
          %vm193 = vcmp.lt.s32.totalorder %v191, 256
          %vm194 = vmand %vm192, %vm193
          %195 = vst.msk [vmem:[#allocation2] sm:$0x3] %vm194, 0.0
          %196 = vst.msk [vmem:[#allocation3] sm:$0x3] %vm194, 0.0
        $region32: #{tpu_custom_call.1} parent=23 // pred_fallthru
          _
        %v197 = vld [vmem:[%s160] sm:$0xff]
        %v198 = vld [vmem:[%s160 + $0x8] sm:$0xff]
        %199 = vrot.lane.b32.xlu0 %v197, 112
        %v200 = vpop.permute.xlu0 %199
        %201 = vrot.lane.b32.xlu0 %v198, 112
        %v202 = vpop.permute.xlu0 %201
        %v203 = vlaneseq
        %v204 = vand.u32 %v203, 127
        %vm205 = vcmp.lt.s32.totalorder %v204, 112
        %v206 = vsel %vm205, %v200, %v202
        %v207 = vsel %vm205, %v202, %v200
        %208 = vrot.lane.b32.xlu0 %v197, 127
        %v209 = vpop.permute.xlu0 %208
        %210 = vrot.lane.b32.xlu0 %v198, 127
        %v211 = vpop.permute.xlu0 %210
        %vm212 = vcmp.lt.s32.totalorder %v204, 127
        %v213 = vsel %vm212, %v209, %v211
        %v214 = vsel %vm212, %v211, %v209
        %v215 = vadd.s32 %v204, 128
        %vm216 = vcmp.lt.s32.totalorder %v204, 240
        %vm217 = vcmp.lt.s32.totalorder %v215, 240
        %v218 = vsub.f32 %v206, %v197
        %v219 = vsub.f32 %v207, %v198
        %v220 = vsel %vm216, %v218, 0.0
        %v221 = vsel %vm217, %v219, 0.0
        %vm222 = vcmp.lt.s32.totalorder %v204, 0
        %v223 = vsub.s32 0, %v204
        %v224 = vsel %vm222, %v223, %v204
        %v225 = vshrl.u32 %v224, 4
        %v226 = vand.u32 %v224, 15
        %v227 = vsub.s32 0, %v226
        %v228 = vsel %vm222, %v227, %v226
        %vm229 = vcmp.lt.s32.totalorder %v215, 0
        %v230 = vsub.s32 0, %v215
        %v231 = vsel %vm229, %v230, %v215
        %v232 = vshrl.u32 %v231, 4
        %v233 = vand.u32 %v231, 15
        %v234 = vsub.s32 0, %v233
        %v235 = vsel %vm229, %v234, %v233
        %vm236 = vcmp.ne.s32.totalorder %v228, 0
        %vm237 = vcmp.ne.s32.totalorder %v235, 0
        %vm238 = vcmp.lt.s32.totalorder %v228, 0
        %vm239 = vcmp.lt.s32.totalorder %v235, 0
        %vm240 = vmand %vm238, %vm236
        %vm241 = vmand %vm239, %vm237
        %v242 = vadd.s32 %v228, 16
        %v243 = vadd.s32 %v235, 16
        %v244 = vsel %vm240, %v242, %v228
        %v245 = vsel %vm241, %v243, %v235
        %vm246 = vcmp.ne.s32.totalorder %v244, 15
        %vm247 = vcmp.ne.s32.totalorder %v245, 15
        %v248 = vsub.f32 %v213, %v197
        %v249 = vsub.f32 %v214, %v198
        %v250 = vsel %vm246, %v248, 0.0
        %v251 = vsel %vm247, %v249, 0.0
        %v252 = vld [vmem:[#allocation2] sm:$0x3]
        %v253 = vmul.f32 %v220, %v220
        %v254 = vmul.f32 %v221, %v221
        %v255 = vrot.slane %v253, 4
        %v256 = vadd.f32 %v253, %v255
        %v257 = vrot.slane %v256, 2
        %v258 = vadd.f32 %v256, %v257
        %v259 = vrot.slane %v258, 1
        %v260 = vadd.f32 %v258, %v259
        %v261 = vrot.slane %v254, 4
        %v262 = vadd.f32 %v254, %v261
        %v263 = vrot.slane %v262, 2
        %v264 = vadd.f32 %v262, %v263
        %v265 = vrot.slane %v264, 1
        %v266 = vadd.f32 %v264, %v265
        %v269 = vcombine.low %v260, %v266
        %v271 = vunpack.c.l.s4 1966171168
        %v272 = vunpack.c.0.s8 %v271
        %v273 = vlaneseq
        %v274 = vshrl.u32 %v273, 7
        %v275 = vsub.s32 %v272, %v274
        %v276 = vrot.slane %v269, %v275
        %v278 = vunpack.c.l.s4 1966171168
        %v279 = vunpack.c.0.s8 %v278
        %v280 = vlaneseq
        %v281 = vshrl.u32 %v280, 7
        %v282 = vsub.s32 %v279, %v281
        %v283 = vrot.slane %v276, %v282
        %v285 = vadd.f32 %v252, %v283
        %v286 = vlaneseq
        %vm287 = vcmp.ge.s32.totalorder %v286, 0
        %vm288 = vcmp.lt.s32.totalorder %v286, 256
        %vm289 = vmand %vm287, %vm288
        %290 = vst.msk [vmem:[#allocation2] sm:$0x3] %vm289, %v285
        %v291 = vld [vmem:[#allocation3] sm:$0x3]
        %v292 = vmul.f32 %v250, %v250
        %v293 = vmul.f32 %v251, %v251
        %v294 = vrot.slane %v292, 4
        %v295 = vadd.f32 %v292, %v294
        %v296 = vrot.slane %v295, 2
        %v297 = vadd.f32 %v295, %v296
        %v298 = vrot.slane %v297, 1
        %v299 = vadd.f32 %v297, %v298
        %v300 = vrot.slane %v293, 4
        %v301 = vadd.f32 %v293, %v300
        %v302 = vrot.slane %v301, 2
        %v303 = vadd.f32 %v301, %v302
        %v304 = vrot.slane %v303, 1
        %v305 = vadd.f32 %v303, %v304
        %v308 = vcombine.low %v299, %v305
        %v310 = vunpack.c.l.s4 1966171168
        %v311 = vunpack.c.0.s8 %v310
        %v312 = vlaneseq
        %v313 = vshrl.u32 %v312, 7
        %v314 = vsub.s32 %v311, %v313
        %v315 = vrot.slane %v308, %v314
        %v317 = vunpack.c.l.s4 1966171168
        %v318 = vunpack.c.0.s8 %v317
        %v319 = vlaneseq
        %v320 = vshrl.u32 %v319, 7
        %v321 = vsub.s32 %v318, %v320
        %v322 = vrot.slane %v315, %v321
        %v324 = vadd.f32 %v291, %v322
        %325 = vst.msk [vmem:[#allocation3] sm:$0x3] %vm289, %v324
        // Predicated region
        $region33: #{tpu_custom_call.1} parent=23 // pred_check
          %p326 = pneg %p187
        $region34: #{tpu_custom_call.1} parent=23 // pred_check_branch
          %328 = sbr.rel (%p326) target = $region36
        $region35: #{tpu_custom_call.1} parent=23 // pred_region
          %v329 = vld [vmem:[#allocation2] sm:$0x3]
          %v331 = vlaneseq
          %v332 = vshrl.u32 %v331, 7
          %v333 = vsub.s32 0, %v332
          %v334 = vrot.slane %v329, %v333
          %v335 = vlaneseq
          %v336 = vshrl.u32 %v335, 7
          %v337 = vsub.s32 1, %v336
          %v338 = vrot.slane %v329, %v337
          %vm341 = vcmask 1040384
          %v342 = vsel %vm341, %v334, 0.0
          %v343 = vsel %vm341, %v338, 0.0
          %v344 = vadd.f32 %v342, %v343
          %345 = vadd.xlane.f32.xlu0 %v344
          %v346 = vpop.xlane.xlu0 %345
          %v347 = vrot.slane %v346, 4
          %v348 = vadd.f32 %v346, %v347
          %v349 = vrot.slane %v348, 2
          %v350 = vadd.f32 %v348, %v349
          %v351 = vrot.slane %v350, 1
          %v352 = vadd.f32 %v350, %v351
          %s353 = vtos %v352
          %v354 = vld [vmem:[#allocation3] sm:$0x3]
          %v356 = vlaneseq
          %v357 = vshrl.u32 %v356, 7
          %v358 = vsub.s32 0, %v357
          %v359 = vrot.slane %v354, %v358
          %v360 = vlaneseq
          %v361 = vshrl.u32 %v360, 7
          %v362 = vsub.s32 1, %v361
          %v363 = vrot.slane %v354, %v362
          %v366 = vsel %vm341, %v359, 0.0
          %v367 = vsel %vm341, %v363, 0.0
          %v368 = vadd.f32 %v366, %v367
          %369 = vadd.xlane.f32.xlu0 %v368
          %v370 = vpop.xlane.xlu0 %369
          %v371 = vrot.slane %v370, 4
          %v372 = vadd.f32 %v370, %v371
          %v373 = vrot.slane %v372, 2
          %v374 = vadd.f32 %v372, %v373
          %v375 = vrot.slane %v374, 1
          %v376 = vadd.f32 %v374, %v375
          %s377 = vtos %v376
          %v378 = vstv %s353
          %379 = vst [vmem:[%s178] sm:$0xff] %v378
          %v380 = vstv %s377
          %381 = vst [vmem:[%s185] sm:$0xff] %v380
        $region36: #{tpu_custom_call.1} parent=23 // pred_fallthru
          _
        %s382 = sand.u32 %s71, 1
        %s383 = scalar_lea.sflag [#allocation6], %s382
        %s384 = sand.u32 %s71, 1
        %s385 = smul.addr %s384, 8
        %s386 = scalar_lea.vmem [#allocation7], %s385
        %s387 = sand.u32 %s97, 1
        %s388 = scalar_lea.sflag [#allocation9], %s387
        %s389 = sand.u32 %s97, 1
        %s390 = smul.addr %s389, 8
        %s391 = scalar_lea.vmem [#allocation8], %s390
        // Predicated region
        $region37: #{tpu_custom_call.1} parent=23 // pred_check
          %p392 = pneg %p81
        $region38: #{tpu_custom_call.1} parent=23 // pred_check_branch
          %394 = sbr.rel (%p392) target = $region40
        $region39: #{tpu_custom_call.1} parent=23 // pred_region
          %s396 = ssub.s32 128, 128
          %397 = vsyncadd %s383, %s396
          %s398 = smul.addr %s27, 128
          %s399 = scalar_lea.hbm %s1, %s398
          %s401 = sshll.u32 %s386, 4
          %s402 = int_to_ptr.vmem [resolvable:$true] %s401
          %404 = dma.vmem_to_hbm [thread:$0]  %s402, 128, %s399, %s383
        $region40: #{tpu_custom_call.1} parent=23 // pred_fallthru
          _
        // Predicated region
        $region41: #{tpu_custom_call.1} parent=23 // pred_check
          %p405 = pneg %p107
        $region42: #{tpu_custom_call.1} parent=23 // pred_check_branch
          %407 = sbr.rel (%p405) target = $region44
        $region43: #{tpu_custom_call.1} parent=23 // pred_region
          %s409 = ssub.s32 128, 128
          %410 = vsyncadd %s388, %s409
          %s411 = smul.addr %s27, 128
          %s412 = scalar_lea.hbm %s2, %s411
          %s414 = sshll.u32 %s391, 4
          %s415 = int_to_ptr.vmem [resolvable:$true] %s414
          %417 = dma.vmem_to_hbm [thread:$0]  %s415, 128, %s412, %s388
        $region44: #{tpu_custom_call.1} parent=23 // pred_fallthru
          _
      $region24: #{tpu_custom_call.1} parent=5 // pred_fallthru
        _
      %p418 = scmp.le.s32.totalorder 2, %s18
      // Predicated region
      $region45: #{tpu_custom_call.1} parent=5 // pred_check
        %p419 = pneg %p418
      $region46: #{tpu_custom_call.1} parent=5 // pred_check_branch
        %421 = sbr.rel (%p419) target = $region48
      $region47: #{tpu_custom_call.1} parent=5 // pred_region
        %s422 = ssub.s32 %s18, 2
        // Predicated region
        $region49: #{tpu_custom_call.1} parent=47 // pred_check
          %p423 = pneg %p87
        $region50: #{tpu_custom_call.1} parent=47 // pred_check_branch
          %425 = sbr.rel (%p423) target = $region52
        $region51: #{tpu_custom_call.1} parent=47 // pred_region
          %s426 = sand.u32 %s72, 1
          %s427 = scalar_lea.sflag [#allocation6], %s426
          %s428 = sand.u32 %s72, 1
          %s429 = smul.addr %s428, 8
          %s430 = scalar_lea.vmem [#allocation7], %s429
          %431 = dma.done %s427, 128
        $region52: #{tpu_custom_call.1} parent=47 // pred_fallthru
          _
        // Predicated region
        $region53: #{tpu_custom_call.1} parent=47 // pred_check
          %p432 = pneg %p113
        $region54: #{tpu_custom_call.1} parent=47 // pred_check_branch
          %434 = sbr.rel (%p432) target = $region56
        $region55: #{tpu_custom_call.1} parent=47 // pred_region
          %s435 = sand.u32 %s98, 1
          %s436 = scalar_lea.sflag [#allocation9], %s435
          %s437 = sand.u32 %s98, 1
          %s438 = smul.addr %s437, 8
          %s439 = scalar_lea.vmem [#allocation8], %s438
          %440 = dma.done %s436, 128
        $region56: #{tpu_custom_call.1} parent=47 // pred_fallthru
          _
      $region48: #{tpu_custom_call.1} parent=5 // pred_fallthru
        _
    $region6: #{tpu_custom_call.1} parent=1 // loop_footer
      %s22 = sadd.s32 1, %s18
    $region7: #{tpu_custom_call.1} parent=1 // loop_footer_branch
      %17 = sbr.rel target = $region3
    $region8: #{tpu_custom_call.1} parent=1 // loop_exit
      _
    %441 = vsyncpa [#allocation5], 1
    %s442 = scalar_lea.sflag [#allocation5], 1
    %443 = vsyncpa %s442, 1
    %444 = vsyncpa [#allocation6], 1
    %s445 = scalar_lea.sflag [#allocation6], 1
    %446 = vsyncpa %s445, 1
    %447 = vsyncpa [#allocation9], 1
    %s448 = scalar_lea.sflag [#allocation9], 1
    %449 = vsyncpa %s448, 1

</llo_original>
